<compile_context>
chip_gen: v5e
topology: v5e:2x2
jax: 0.10.0
libtpu: 0.0.40
codegen_flags: <defaults>
</compile_context>

<pallas_src>
import jax
import jax.numpy as jnp
import numpy as np
from jax import lax
from jax.experimental import pallas as pl
from jax.experimental.pallas import tpu as pltpu

KH = KW = 3                       # per-layer kernel size
STRIDE = 2                        # per-layer stride
RF = STRIDE * (KH - 1) + KH       # 7: receptive field of conv2∘conv1
S_EFF = STRIDE * STRIDE           # 4: effective stride of conv2∘conv1


def _conv_out(n):
    # VALID padding, kernel 3, stride 2
    return (n - KH) // STRIDE + 1


def _compose_weights(w1_oihw, w2_oihw):
    """Fold conv2∘conv1 (both bias-free, 3x3, stride 2, VALID) into one 7x7 stride-4
    conv weight (cout, cin, 7, 7) in f32:

        out[o, y, x] = sum_{c,r,s} W_eff[o,c,r,s] * x[c, 4y + r, 4x + s]
        W_eff[o, c, 2*i2 + i1, 2*j2 + j1] += sum_m w2[o,m,i2,j2] * w1[m,c,i1,j1]
    """
    cout = w2_oihw.shape[0]
    cin = w1_oihw.shape[1]
    w1 = w1_oihw.astype(jnp.float32)
    w2 = w2_oihw.astype(jnp.float32)
    w_eff = jnp.zeros((cout, cin, RF, RF), jnp.float32)
    for i2 in range(KH):
        for j2 in range(KW):
            contrib = jnp.einsum("om,mcij->ocij", w2[:, :, i2, j2], w1)  # (cout,cin,3,3)
            w_eff = w_eff.at[:, :, STRIDE * i2:STRIDE * i2 + KH,
                             STRIDE * j2:STRIDE * j2 + KW].add(contrib)
    return w_eff


def prepare_weights(w1_oihw, w2_oihw):
    """One-time prep: composed weight as a (kp, cout) bf16 matrix, K ordered (r, s, c)."""
    cin = w1_oihw.shape[1]
    cout = w2_oihw.shape[0]
    w_eff = _compose_weights(w1_oihw, w2_oihw)                      # (cout, cin, 7, 7)
    k = RF * RF * cin                                               # 147 for cin=3
    kp = k + (-k) % 16                                              # 160: bf16 align
    w_mat = jnp.transpose(w_eff, (2, 3, 1, 0)).reshape(k, cout)     # rows = (r, s, c)
    w_mat = jnp.pad(w_mat, ((0, kp - k), (0, 0))).astype(jnp.bfloat16)
    return w_mat


def _tensorcores_per_device():
    """Return 2 only for devices that expose two TensorCores (v4/v5p megacore, v7x)."""
    kind = getattr(jax.devices()[0], "device_kind", "").lower()
    if "lite" in kind or "v5e" in kind or "v6" in kind:
        return 1
    if "v4" in kind or "v5p" in kind or "v7" in kind or "7x" in kind:
        return 2
    return 1


def _im2col_patches(x_nhwc, oh, ow, rows_p, kp):
    """(B,H,W,C) f32 -> (rows_p, kp) bf16 patch matrix for the composed 7x7/stride-4 conv.

    Rows ordered (b, oh, ow); K ordered (r, s, c) to match prepare_weights.  Only ~a
    dozen XLA ops: 9 static window slices + stack + reshape + pad + cast.
    """
    B, H, W, C = x_nhwc.shape
    wins = [x_nhwc[:, S_EFF * i:S_EFF * i + RF, S_EFF * j:S_EFF * j + RF, :]
            for i in range(oh) for j in range(ow)]                  # 9 static slices
    p = jnp.stack(wins, axis=1).reshape(B * oh * ow, RF * RF * C)
    p = jnp.pad(p, ((0, rows_p - B * oh * ow), (0, kp - RF * RF * C)))
    return p.astype(jnp.bfloat16)


def _composed_conv_kernel(p_ref, w_ref, o_ref):
    """Single MXU matmul: bf16 patches x bf16 composed weights, f32 accumulation."""
    o_ref[...] = jnp.dot(p_ref[...], w_ref[...], preferred_element_type=jnp.float32)


@jax.jit
def model2conv_forward(x_nchw, w_mat):
    B = x_nchw.shape[0]
    kp, cout = w_mat.shape

    x = jnp.transpose(x_nchw, (0, 2, 3, 1)).astype(jnp.float32)     # NHWC, once
    H, W = x.shape[1], x.shape[2]
    OH, OW = _conv_out(_conv_out(H)), _conv_out(_conv_out(W))        # == (H-7)//4 + 1
    rows = B * OH * OW
    rows_p = rows + (-rows) % 16                                     # bf16 sublane align
    p = _im2col_patches(x, OH, OW, rows_p, kp)                       # (rows_p, kp) bf16

    # Generation-aware cout split: only split when 2 TensorCores exist; on single-TC
    # chips a 2-step "parallel" grid is just a serial loop with per-step overhead.
    # Weights are only kp*cout*2B (~160 KiB at dim=512), so VMEM never constrains this
    # on any generation (v5e/v6e 128 MiB, v7x 64 MiB physical / 32 MiB scoped default).
    if _tensorcores_per_device() >= 2 and cout % 256 == 0:
        nb = cout // 2
    else:
        nb = cout
    grid = (cout // nb,)

    out = pl.pallas_call(
        _composed_conv_kernel,
        out_shape=jax.ShapeDtypeStruct((rows_p, cout), jnp.float32),
        grid=grid,
        in_specs=[
            pl.BlockSpec((rows_p, kp), lambda n: (0, 0)),    # patches (full, ~10 KiB)
            pl.BlockSpec((kp, nb), lambda n: (0, n)),        # composed weights (cout blk)
        ],
        out_specs=pl.BlockSpec((rows_p, nb), lambda n: (0, n)),      # lane-dense output
        compiler_params=pltpu.CompilerParams(
            dimension_semantics=("parallel",),
        ),
    )(p, w_mat)

    out = out[:rows].reshape(B, OH, OW, cout)
    return jnp.transpose(out, (0, 3, 1, 2))                          # back to NCHW


def _reference_two_convs_f32(x, w1, w2):
    conv = lambda a, w: lax.conv_general_dilated(
        a, w, (STRIDE, STRIDE), "VALID",
        dimension_numbers=("NCHW", "OIHW", "NCHW"),
        precision=lax.Precision.HIGHEST)
    return conv(conv(x, w1), w2)


if __name__ == "__main__":
    dim = 512  # module default: nn.Conv2d(3, dim, 3, 2) -> nn.Conv2d(dim, dim, 3, 2)
    key = jax.random.PRNGKey(0)
    kx, k1, k2 = jax.random.split(key, 3)

    # module's get_example_inputs(): torch.rand(2, 3, 16, 16)
    x = jax.random.uniform(kx, (2, 3, 16, 16), dtype=jnp.float32)
    w1 = jax.random.normal(k1, (dim, 3, 3, 3), dtype=jnp.float32) * 0.1
    w2 = jax.random.normal(k2, (dim, dim, 3, 3), dtype=jnp.float32) * 0.05

    w_mat = prepare_weights(w1, w2)                 # one-time weight composition + layout
    out = jax.block_until_ready(model2conv_forward(x, w_mat))
    assert out.shape == (2, dim, 3, 3), out.shape

    # Matched-precision reference: the SAME composed 7x7/stride-4 conv with bf16-cast
    # operands and f32 accumulation (composition moves the bf16 rounding point, so the
    # old "bf16 intermediate activation" reference no longer applies).
    bf = lambda a: a.astype(jnp.bfloat16).astype(jnp.float32)
    w_eff = _compose_weights(w1, w2)
    ref_matched = lax.conv_general_dilated(
        bf(x), bf(w_eff), (S_EFF, S_EFF), "VALID",
        dimension_numbers=("NCHW", "OIHW", "NCHW"),
        precision=lax.Precision.HIGHEST)
    # Full-f32 two-conv reference (the module's exact semantics; loose bound because the
    # kernel feeds bf16 operands to the MXU).
    ref_f32 = _reference_two_convs_f32(x, w1, w2)

    np.testing.assert_allclose(np.asarray(out), np.asarray(ref_matched),
                               rtol=2e-3, atol=2e-3)
    np.testing.assert_allclose(np.asarray(out), np.asarray(ref_f32),
                               rtol=5e-2, atol=5e-2)

    print("KERNEL_OK")
</pallas_src>

<mosaic_0001>
module attributes {stable_mosaic.version = 11 : i64} {
  func.func @_composed_conv_kernel(%arg0: i32, %arg1: memref<32x160xbf16, #tpu.memory_space<vmem>>, %arg2: memref<160x512xbf16, #tpu.memory_space<vmem>>, %arg3: memref<32x512xf32, #tpu.memory_space<vmem>>) attributes {dimension_semantics = [#tpu.dimension_semantics<parallel>], iteration_bounds = array<i64: 1>, scalar_prefetch = 0 : i64, scratch_operands = 0 : i64, tpu.core_type = #tpu.core_type<tc>, window_params = [{pipeline_mode = #tpu.pipeline_mode<synchronous>, transform_indices = @transform_0, window_bounds = array<i64: 32, 160>}, {transform_indices = @transform_1, window_bounds = array<i64: 160, 512>}, {transform_indices = @transform_2, window_bounds = array<i64: 32, 512>}]} {
    %c0 = arith.constant 0 : index
    %c0_0 = arith.constant 0 : index
    %0 = vector.load %arg1[%c0, %c0_0] : memref<32x160xbf16, #tpu.memory_space<vmem>>, vector<32x160xbf16>
    %c0_1 = arith.constant 0 : index
    %c0_2 = arith.constant 0 : index
    %1 = vector.load %arg2[%c0_1, %c0_2] : memref<160x512xbf16, #tpu.memory_space<vmem>>, vector<160x512xbf16>
    %cst = arith.constant dense<0.000000e+00> : vector<32x512xf32>
    %2 = tpu.matmul %0, %1, %cst {dimension_numbers = #tpu.dot_dimension_numbers<[1], [0], [0], [1], [0, 0, 1, 1], [], []>} : vector<32x160xbf16>, vector<160x512xbf16>, vector<32x512xf32> -> vector<32x512xf32>
    %c0_3 = arith.constant 0 : index
    %c0_4 = arith.constant 0 : index
    %3 = vector.load %arg3[%c0_3, %c0_4] : memref<32x512xf32, #tpu.memory_space<vmem>>, vector<32x512xf32>
    tpu.vector_store %arg3[%c0_3, %c0_4], %2 {strides = array<i32>} : memref<32x512xf32, #tpu.memory_space<vmem>>, vector<32x512xf32>,
    return
  }
  func.func @transform_0(%arg0: i32) -> (i32, i32) {
    %c0_i32 = arith.constant 0 : i32
    %c0_i32_0 = arith.constant 0 : i32
    %c0_i32_1 = arith.constant 0 : i32
    return %c0_i32, %c0_i32_0 : i32, i32
  }
  func.func @transform_1(%arg0: i32) -> (i32, i32) {
    %c0_i32 = arith.constant 0 : i32
    %c0_i32_0 = arith.constant 0 : i32
    return %c0_i32, %arg0 : i32, i32
  }
  func.func @transform_2(%arg0: i32) -> (i32, i32) {
    %c0_i32 = arith.constant 0 : i32
    %c0_i32_0 = arith.constant 0 : i32
    return %c0_i32, %arg0 : i32, i32
  }
}

</mosaic_0001>

<llo_original>
// kernel: model2conv_forward.1
$region0: #{model2conv_forward.1}
  #allocation0 [shape = 'u32[]', space=smem, size = 0x4, offset = 0x4, fixed_abs, tag = 'smem constant byte address 0x4 - core index']
  #allocation1 [shape = 'u32[72,128]{1,0:T(1,128)}', space=vmem, size = 0x9000, scoped, tag = 'internal scratch']
  %s0 = inlined_call_operand.vmem [shape: bf16[32,160], index: 0, kind: input, shape index: {}]
  %s1 = inlined_call_operand.vmem [shape: bf16[160,512], index: 1, kind: input, shape index: {}]
  %s2 = inlined_call_operand.vmem [shape: f32[32,512], index: 2, kind: output, shape index: {}]
  %s3 = sld [smem:[#allocation0]]
  $region18: #{model2conv_forward.1} parent=0
    _
  %s5 = ssub.s32 1, %s3
  %s6 = scalar_select 0, %s5, %s3
  // Predicated region
  $region2: #{model2conv_forward.1} parent=0 // pred_check
    _
  $region3: #{model2conv_forward.1} parent=0 // pred_check_branch
    %8 = sbr.rel (0) target = $region5
  $region4: #{model2conv_forward.1} parent=0 // pred_region
    _
  $region5: #{model2conv_forward.1} parent=0 // pred_fallthru
    _
  // Predicated region
  $region6: #{model2conv_forward.1} parent=0 // pred_check
    _
  $region7: #{model2conv_forward.1} parent=0 // pred_check_branch
    %10 = sbr.rel (0) target = $region9
  $region8: #{model2conv_forward.1} parent=0 // pred_region
    _
  $region9: #{model2conv_forward.1} parent=0 // pred_fallthru
    _
  %v12 = vld [vmem:[%s0] sm:$0xff]
  %v13 = vld [vmem:[%s0 + $0x8] sm:$0xff]
  %v14 = vld [vmem:[%s0 + $0x10] sm:$0xff]
  %v15 = vld [vmem:[%s0 + $0x18] sm:$0xff]
  %v16 = vld [vmem:[%s1] sm:$0xff]
  %v17 = vld [vmem:[%s1 + $0x8] sm:$0xff]
  %v18 = vld [vmem:[%s1 + $0x10] sm:$0xff]
  %v19 = vld [vmem:[%s1 + $0x18] sm:$0xff]
  %v20 = vld [vmem:[%s1 + $0x20] sm:$0xff]
  %v21 = vld [vmem:[%s1 + $0x28] sm:$0xff]
  %v22 = vld [vmem:[%s1 + $0x30] sm:$0xff]
  %v23 = vld [vmem:[%s1 + $0x38] sm:$0xff]
  %v24 = vld [vmem:[%s1 + $0x40] sm:$0xff]
  %v25 = vld [vmem:[%s1 + $0x48] sm:$0xff]
  %v26 = vld [vmem:[%s1 + $0x50] sm:$0xff]
  %v27 = vld [vmem:[%s1 + $0x58] sm:$0xff]
  %v28 = vld [vmem:[%s1 + $0x60] sm:$0xff]
  %v29 = vld [vmem:[%s1 + $0x68] sm:$0xff]
  %v30 = vld [vmem:[%s1 + $0x70] sm:$0xff]
  %v31 = vld [vmem:[%s1 + $0x78] sm:$0xff]
  %v32 = vld [vmem:[%s1 + $0x80] sm:$0xff]
  %v33 = vld [vmem:[%s1 + $0x88] sm:$0xff]
  %v34 = vld [vmem:[%s1 + $0x90] sm:$0xff]
  %v35 = vld [vmem:[%s1 + $0x98] sm:$0xff]
  %v36 = vld [vmem:[%s1 + $0xa0] sm:$0xff]
  %v37 = vld [vmem:[%s1 + $0xa8] sm:$0xff]
  %v38 = vld [vmem:[%s1 + $0xb0] sm:$0xff]
  %v39 = vld [vmem:[%s1 + $0xb8] sm:$0xff]
  %v40 = vld [vmem:[%s1 + $0xc0] sm:$0xff]
  %v41 = vld [vmem:[%s1 + $0xc8] sm:$0xff]
  %v42 = vld [vmem:[%s1 + $0xd0] sm:$0xff]
  %v43 = vld [vmem:[%s1 + $0xd8] sm:$0xff]
  %v44 = vld [vmem:[%s1 + $0xe0] sm:$0xff]
  %v45 = vld [vmem:[%s1 + $0xe8] sm:$0xff]
  %v46 = vld [vmem:[%s1 + $0xf0] sm:$0xff]
  %v47 = vld [vmem:[%s1 + $0xf8] sm:$0xff]
  %v48 = vld [vmem:[%s1 + $0x100] sm:$0xff]
  %v49 = vld [vmem:[%s1 + $0x108] sm:$0xff]
  %v50 = vld [vmem:[%s1 + $0x110] sm:$0xff]
  %v51 = vld [vmem:[%s1 + $0x118] sm:$0xff]
  %v52 = vld [vmem:[%s1 + $0x120] sm:$0xff]
  %v53 = vld [vmem:[%s1 + $0x128] sm:$0xff]
  %v54 = vld [vmem:[%s1 + $0x130] sm:$0xff]
  %v55 = vld [vmem:[%s1 + $0x138] sm:$0xff]
  %v60 = vunpack.c.l.b16 %v12
  %v61 = vunpack.c.h.b16 %v12
  %v62 = vunpack.c.l.b16 %v13
  %v63 = vunpack.c.h.b16 %v13
  %v64 = vunpack.c.l.b16 %v14
  %v65 = vunpack.c.h.b16 %v14
  %v66 = vunpack.c.l.b16 %v15
  %v67 = vunpack.c.h.b16 %v15
  %v68 = vpack.c.b16 %v62, %v60
  %v69 = vpack.c.b16 %v63, %v61
  %v70 = vpack.c.b16 %v66, %v64
  %v71 = vpack.c.b16 %v67, %v65
  %v114 = vunpack.c.l.b16 %v16
  %v115 = vunpack.c.h.b16 %v16
  %v116 = vunpack.c.l.b16 %v17
  %v117 = vunpack.c.h.b16 %v17
  %v118 = vunpack.c.l.b16 %v18
  %v119 = vunpack.c.h.b16 %v18
  %v120 = vunpack.c.l.b16 %v19
  %v121 = vunpack.c.h.b16 %v19
  %v122 = vunpack.c.l.b16 %v20
  %v123 = vunpack.c.h.b16 %v20
  %v124 = vunpack.c.l.b16 %v21
  %v125 = vunpack.c.h.b16 %v21
  %v126 = vunpack.c.l.b16 %v22
  %v127 = vunpack.c.h.b16 %v22
  %v128 = vunpack.c.l.b16 %v23
  %v129 = vunpack.c.h.b16 %v23
  %v130 = vunpack.c.l.b16 %v24
  %v131 = vunpack.c.h.b16 %v24
  %v132 = vunpack.c.l.b16 %v25
  %v133 = vunpack.c.h.b16 %v25
  %v134 = vunpack.c.l.b16 %v26
  %v135 = vunpack.c.h.b16 %v26
  %v136 = vunpack.c.l.b16 %v27
  %v137 = vunpack.c.h.b16 %v27
  %v138 = vunpack.c.l.b16 %v28
  %v139 = vunpack.c.h.b16 %v28
  %v140 = vunpack.c.l.b16 %v29
  %v141 = vunpack.c.h.b16 %v29
  %v142 = vunpack.c.l.b16 %v30
  %v143 = vunpack.c.h.b16 %v30
  %v144 = vunpack.c.l.b16 %v31
  %v145 = vunpack.c.h.b16 %v31
  %v146 = vunpack.c.l.b16 %v32
  %v147 = vunpack.c.h.b16 %v32
  %v148 = vunpack.c.l.b16 %v33
  %v149 = vunpack.c.h.b16 %v33
  %v150 = vunpack.c.l.b16 %v34
  %v151 = vunpack.c.h.b16 %v34
  %v152 = vunpack.c.l.b16 %v35
  %v153 = vunpack.c.h.b16 %v35
  %v154 = vunpack.c.l.b16 %v36
  %v155 = vunpack.c.h.b16 %v36
  %v156 = vunpack.c.l.b16 %v37
  %v157 = vunpack.c.h.b16 %v37
  %v158 = vunpack.c.l.b16 %v38
  %v159 = vunpack.c.h.b16 %v38
  %v160 = vunpack.c.l.b16 %v39
  %v161 = vunpack.c.h.b16 %v39
  %v162 = vunpack.c.l.b16 %v40
  %v163 = vunpack.c.h.b16 %v40
  %v164 = vunpack.c.l.b16 %v41
  %v165 = vunpack.c.h.b16 %v41
  %v166 = vunpack.c.l.b16 %v42
  %v167 = vunpack.c.h.b16 %v42
  %v168 = vunpack.c.l.b16 %v43
  %v169 = vunpack.c.h.b16 %v43
  %v170 = vunpack.c.l.b16 %v44
  %v171 = vunpack.c.h.b16 %v44
  %v172 = vunpack.c.l.b16 %v45
  %v173 = vunpack.c.h.b16 %v45
  %v174 = vunpack.c.l.b16 %v46
  %v175 = vunpack.c.h.b16 %v46
  %v176 = vunpack.c.l.b16 %v47
  %v177 = vunpack.c.h.b16 %v47
  %v178 = vunpack.c.l.b16 %v48
  %v179 = vunpack.c.h.b16 %v48
  %v180 = vunpack.c.l.b16 %v49
  %v181 = vunpack.c.h.b16 %v49
  %v182 = vunpack.c.l.b16 %v50
  %v183 = vunpack.c.h.b16 %v50
  %v184 = vunpack.c.l.b16 %v51
  %v185 = vunpack.c.h.b16 %v51
  %v186 = vunpack.c.l.b16 %v52
  %v187 = vunpack.c.h.b16 %v52
  %v188 = vunpack.c.l.b16 %v53
  %v189 = vunpack.c.h.b16 %v53
  %v190 = vunpack.c.l.b16 %v54
  %v191 = vunpack.c.h.b16 %v54
  %v192 = vunpack.c.l.b16 %v55
  %v193 = vunpack.c.h.b16 %v55
  %v194 = vpack.c.b16 %v118, %v114
  %v195 = vpack.c.b16 %v119, %v115
  %v196 = vpack.c.b16 %v120, %v116
  %v197 = vpack.c.b16 %v121, %v117
  %v198 = vpack.c.b16 %v126, %v122
  %v199 = vpack.c.b16 %v127, %v123
  %v200 = vpack.c.b16 %v128, %v124
  %v201 = vpack.c.b16 %v129, %v125
  %v202 = vpack.c.b16 %v134, %v130
  %v203 = vpack.c.b16 %v135, %v131
  %v204 = vpack.c.b16 %v136, %v132
  %v205 = vpack.c.b16 %v137, %v133
  %v206 = vpack.c.b16 %v142, %v138
  %v207 = vpack.c.b16 %v143, %v139
  %v208 = vpack.c.b16 %v144, %v140
  %v209 = vpack.c.b16 %v145, %v141
  %v210 = vpack.c.b16 %v150, %v146
  %v211 = vpack.c.b16 %v151, %v147
  %v212 = vpack.c.b16 %v152, %v148
  %v213 = vpack.c.b16 %v153, %v149
  %v214 = vpack.c.b16 %v158, %v154
  %v215 = vpack.c.b16 %v159, %v155
  %v216 = vpack.c.b16 %v160, %v156
  %v217 = vpack.c.b16 %v161, %v157
  %v218 = vpack.c.b16 %v166, %v162
  %v219 = vpack.c.b16 %v167, %v163
  %v220 = vpack.c.b16 %v168, %v164
  %v221 = vpack.c.b16 %v169, %v165
  %v222 = vpack.c.b16 %v174, %v170
  %v223 = vpack.c.b16 %v175, %v171
  %v224 = vpack.c.b16 %v176, %v172
  %v225 = vpack.c.b16 %v177, %v173
  %v226 = vpack.c.b16 %v182, %v178
  %v227 = vpack.c.b16 %v183, %v179
  %v228 = vpack.c.b16 %v184, %v180
  %v229 = vpack.c.b16 %v185, %v181
  %v230 = vpack.c.b16 %v190, %v186
  %v231 = vpack.c.b16 %v191, %v187
  %v232 = vpack.c.b16 %v192, %v188
  %v233 = vpack.c.b16 %v193, %v189
  %vm274 = vcmask 261120
  %v276 = vsel %vm274, %v69, 0
  %v279 = vsel %vm274, %v71, 0
  %281 = vmatpush.bf16.msra.mxu0 %v222
  %282 = vmatpush.bf16.msra.mxu0 %v218
  %283 = vmatpush.bf16.msra.mxu0 %v214
  %284 = vmatpush.bf16.msra.mxu0 %v210
  %285 = vmatpush.bf16.msra.mxu0 %v206
  %286 = vmatpush.bf16.msra.mxu0 %v202
  %287 = vmatpush.bf16.msra.mxu0 %v198
  %288 = vmatpush.bf16.msra.mxu0 %v194
  %289 = vmatmul.bf16.gmra.mxu0 %v68
  %v290 = vpop.f32.mrf.mxu0
  %v291 = vadd.f32 0.0, %v290
  %v292 = vpop.f32.mrf.mxu0
  %v293 = vadd.f32 0.0, %v292
  %294 = vmatmul.bf16.gmra.mxu0 %v70
  %v295 = vpop.f32.mrf.mxu0
  %v296 = vadd.f32 0.0, %v295
  %v297 = vpop.f32.mrf.mxu0
  %v298 = vadd.f32 0.0, %v297
  %299 = vdwg.mxu0
  %300 = vmatpush.bf16.msra.mxu0 0
  %301 = vmatpush.bf16.msra.mxu0 0
  %302 = vmatpush.bf16.msra.mxu0 0
  %303 = vmatpush.bf16.msra.mxu0 0
  %304 = vmatpush.bf16.msra.mxu0 0
  %305 = vmatpush.bf16.msra.mxu0 0
  %306 = vmatpush.bf16.msra.mxu0 %v230
  %307 = vmatpush.bf16.msra.mxu0 %v226
  %308 = vmatmul.bf16.gmra.mxu0 %v276
  %v309 = vpop.f32.mrf.mxu0
  %v310 = vadd.f32 %v291, %v309
  %v311 = vpop.f32.mrf.mxu0
  %v312 = vadd.f32 %v293, %v311
  %313 = vmatmul.bf16.gmra.mxu0 %v279
  %v314 = vpop.f32.mrf.mxu0
  %v315 = vadd.f32 %v296, %v314
  %v316 = vpop.f32.mrf.mxu0
  %v317 = vadd.f32 %v298, %v316
  %318 = vdwg.mxu0
  %319 = vmatpush.bf16.msra.mxu0 %v223
  %320 = vmatpush.bf16.msra.mxu0 %v219
  %321 = vmatpush.bf16.msra.mxu0 %v215
  %322 = vmatpush.bf16.msra.mxu0 %v211
  %323 = vmatpush.bf16.msra.mxu0 %v207
  %324 = vmatpush.bf16.msra.mxu0 %v203
  %325 = vmatpush.bf16.msra.mxu0 %v199
  %326 = vmatpush.bf16.msra.mxu0 %v195
  %327 = vmatmul.bf16.gmra.mxu0 %v68
  %v328 = vpop.f32.mrf.mxu0
  %v329 = vadd.f32 0.0, %v328
  %v330 = vpop.f32.mrf.mxu0
  %v331 = vadd.f32 0.0, %v330
  %332 = vmatmul.bf16.gmra.mxu0 %v70
  %v333 = vpop.f32.mrf.mxu0
  %v334 = vadd.f32 0.0, %v333
  %v335 = vpop.f32.mrf.mxu0
  %v336 = vadd.f32 0.0, %v335
  %337 = vdwg.mxu0
  %338 = vmatpush.bf16.msra.mxu0 0
  %339 = vmatpush.bf16.msra.mxu0 0
  %340 = vmatpush.bf16.msra.mxu0 0
  %341 = vmatpush.bf16.msra.mxu0 0
  %342 = vmatpush.bf16.msra.mxu0 0
  %343 = vmatpush.bf16.msra.mxu0 0
  %344 = vmatpush.bf16.msra.mxu0 %v231
  %345 = vmatpush.bf16.msra.mxu0 %v227
  %346 = vmatmul.bf16.gmra.mxu0 %v276
  %v347 = vpop.f32.mrf.mxu0
  %v348 = vadd.f32 %v329, %v347
  %v349 = vpop.f32.mrf.mxu0
  %v350 = vadd.f32 %v331, %v349
  %351 = vmatmul.bf16.gmra.mxu0 %v279
  %v352 = vpop.f32.mrf.mxu0
  %v353 = vadd.f32 %v334, %v352
  %v354 = vpop.f32.mrf.mxu0
  %v355 = vadd.f32 %v336, %v354
  %356 = vdwg.mxu0
  %357 = vmatpush.bf16.msra.mxu0 %v224
  %358 = vmatpush.bf16.msra.mxu0 %v220
  %359 = vmatpush.bf16.msra.mxu0 %v216
  %360 = vmatpush.bf16.msra.mxu0 %v212
  %361 = vmatpush.bf16.msra.mxu0 %v208
  %362 = vmatpush.bf16.msra.mxu0 %v204
  %363 = vmatpush.bf16.msra.mxu0 %v200
  %364 = vmatpush.bf16.msra.mxu0 %v196
  %365 = vmatmul.bf16.gmra.mxu0 %v68
  %v366 = vpop.f32.mrf.mxu0
  %v367 = vadd.f32 0.0, %v366
  %v368 = vpop.f32.mrf.mxu0
  %v369 = vadd.f32 0.0, %v368
  %370 = vmatmul.bf16.gmra.mxu0 %v70
  %v371 = vpop.f32.mrf.mxu0
  %v372 = vadd.f32 0.0, %v371
  %v373 = vpop.f32.mrf.mxu0
  %v374 = vadd.f32 0.0, %v373
  %375 = vdwg.mxu0
  %376 = vmatpush.bf16.msra.mxu0 0
  %377 = vmatpush.bf16.msra.mxu0 0
  %378 = vmatpush.bf16.msra.mxu0 0
  %379 = vmatpush.bf16.msra.mxu0 0
  %380 = vmatpush.bf16.msra.mxu0 0
  %381 = vmatpush.bf16.msra.mxu0 0
  %382 = vmatpush.bf16.msra.mxu0 %v232
  %383 = vmatpush.bf16.msra.mxu0 %v228
  %384 = vmatmul.bf16.gmra.mxu0 %v276
  %v385 = vpop.f32.mrf.mxu0
  %v386 = vadd.f32 %v367, %v385
  %v387 = vpop.f32.mrf.mxu0
  %v388 = vadd.f32 %v369, %v387
  %389 = vmatmul.bf16.gmra.mxu0 %v279
  %v390 = vpop.f32.mrf.mxu0
  %v391 = vadd.f32 %v372, %v390
  %v392 = vpop.f32.mrf.mxu0
  %v393 = vadd.f32 %v374, %v392
  %394 = vdwg.mxu0
  %395 = vmatpush.bf16.msra.mxu0 %v225
  %396 = vmatpush.bf16.msra.mxu0 %v221
  %397 = vmatpush.bf16.msra.mxu0 %v217
  %398 = vmatpush.bf16.msra.mxu0 %v213
  %399 = vmatpush.bf16.msra.mxu0 %v209
  %400 = vmatpush.bf16.msra.mxu0 %v205
  %401 = vmatpush.bf16.msra.mxu0 %v201
  %402 = vmatpush.bf16.msra.mxu0 %v197
  %403 = vmatmul.bf16.gmra.mxu0 %v68
  %v404 = vpop.f32.mrf.mxu0
  %v405 = vadd.f32 0.0, %v404
  %v406 = vpop.f32.mrf.mxu0
  %v407 = vadd.f32 0.0, %v406
  %408 = vmatmul.bf16.gmra.mxu0 %v70
  %v409 = vpop.f32.mrf.mxu0
  %v410 = vadd.f32 0.0, %v409
  %v411 = vpop.f32.mrf.mxu0
  %v412 = vadd.f32 0.0, %v411
  %413 = vdwg.mxu0
  %414 = vmatpush.bf16.msra.mxu0 0
  %415 = vmatpush.bf16.msra.mxu0 0
  %416 = vmatpush.bf16.msra.mxu0 0
  %417 = vmatpush.bf16.msra.mxu0 0
  %418 = vmatpush.bf16.msra.mxu0 0
  %419 = vmatpush.bf16.msra.mxu0 0
  %420 = vmatpush.bf16.msra.mxu0 %v233
  %421 = vmatpush.bf16.msra.mxu0 %v229
  %422 = vmatmul.bf16.gmra.mxu0 %v276
  %v423 = vpop.f32.mrf.mxu0
  %v424 = vadd.f32 %v405, %v423
  %v425 = vpop.f32.mrf.mxu0
  %v426 = vadd.f32 %v407, %v425
  %427 = vmatmul.bf16.gmra.mxu0 %v279
  %v428 = vpop.f32.mrf.mxu0
  %v429 = vadd.f32 %v410, %v428
  %v430 = vpop.f32.mrf.mxu0
  %v431 = vadd.f32 %v412, %v430
  %432 = vdwg.mxu0
  %433 = vst [vmem:[%s2] sm:$0xff] %v310
  %434 = vst [vmem:[%s2 + $0x8] sm:$0xff] %v348
  %435 = vst [vmem:[%s2 + $0x10] sm:$0xff] %v386
  %436 = vst [vmem:[%s2 + $0x18] sm:$0xff] %v424
  %437 = vst [vmem:[%s2 + $0x20] sm:$0xff] %v312
  %438 = vst [vmem:[%s2 + $0x28] sm:$0xff] %v350
  %439 = vst [vmem:[%s2 + $0x30] sm:$0xff] %v388
  %440 = vst [vmem:[%s2 + $0x38] sm:$0xff] %v426
  %441 = vst [vmem:[%s2 + $0x40] sm:$0xff] %v315
  %442 = vst [vmem:[%s2 + $0x48] sm:$0xff] %v353
  %443 = vst [vmem:[%s2 + $0x50] sm:$0xff] %v391
  %444 = vst [vmem:[%s2 + $0x58] sm:$0xff] %v429
  %445 = vst [vmem:[%s2 + $0x60] sm:$0xff] %v317
  %446 = vst [vmem:[%s2 + $0x68] sm:$0xff] %v355
  %447 = vst [vmem:[%s2 + $0x70] sm:$0xff] %v393
  %448 = vst [vmem:[%s2 + $0x78] sm:$0xff] %v431
  // Predicated region
  $region10: #{model2conv_forward.1} parent=0 // pred_check
    _
  $region11: #{model2conv_forward.1} parent=0 // pred_check_branch
    %450 = sbr.rel (0) target = $region13
  $region12: #{model2conv_forward.1} parent=0 // pred_region
    _
  $region13: #{model2conv_forward.1} parent=0 // pred_fallthru
    _
  // Predicated region
  $region14: #{model2conv_forward.1} parent=0 // pred_check
    _
  $region15: #{model2conv_forward.1} parent=0 // pred_check_branch
    %452 = sbr.rel (0) target = $region17
  $region16: #{model2conv_forward.1} parent=0 // pred_region
    _
  $region17: #{model2conv_forward.1} parent=0 // pred_fallthru
    _

</llo_original>
